<compile_context>
chip_gen: v6e
topology: v6e:2x2x1
jax: 0.10.0
libtpu: 0.0.40
codegen_flags: <defaults>
</compile_context>

<pallas_src>
import jax
import jax.numpy as jnp
from jax.experimental import pallas as pl
from jax.experimental.pallas import tpu as pltpu


def _round_up(x: int, m: int) -> int:
    return ((x + m - 1) // m) * m


def _scaling_kernel(x_ref, scales_ref, o_ref):
    # x_ref:      (TB, FB) input tile
    # scales_ref: (2,  FB) row 0 = (max - min), row 1 = min (pre-folded in wrapper)
    # o_ref:      (TB, FB) output tile
    diff = scales_ref[0:1, :]          # (1, FB) -> broadcast over rows
    mn = scales_ref[1:2, :]
    o_ref[...] = (diff * x_ref[...] + mn).astype(o_ref.dtype)


def scaling_layer(x, min_scale, max_scale, *,
                  tile_bytes=6 << 20,
                  small_threshold=256 * 1024,
                  compute_dtype=None):
    """Applies (max_scale - min_scale) * x + min_scale, broadcasting over batch.

    x:          [B, F]
    min_scale:  [F]
    max_scale:  [F]
    """
    B, F = x.shape
    out_dtype = x.dtype
    itemsize = jnp.dtype(x.dtype).itemsize
    if compute_dtype is None:
        # bf16 stays bf16 (good on v6e/v7x). On v5e (no bf16 VPU) pass
        # compute_dtype=jnp.float32 for bf16 inputs.
        compute_dtype = x.dtype

    min_scale = jnp.asarray(min_scale)
    max_scale = jnp.asarray(max_scale)
    diff = (max_scale - min_scale).astype(compute_dtype)   # fold subtract into wrapper (O(F))
    mn = min_scale.astype(compute_dtype)

    # Tiny inputs: kernel launch + 1-step grid is pure overhead; use fused XLA.
    if B * F * itemsize < small_threshold:
        return (diff * x.astype(compute_dtype) + mn).astype(out_dtype)

    sublane = {4: 8, 2: 16, 1: 32}.get(itemsize, 8)

    # Lane-dense stores only for narrow feature dims: pad F up to 128.
    # For F >= 128 keep the array unpadded (full-F or 128-multiple feature
    # blocks; Pallas masks the ragged edge) -> no extra HBM pass for pad/slice.
    F_work = F
    x_work = x
    if F < 128:
        F_work = 128
        x_work = jnp.pad(x, ((0, 0), (0, F_work - F)))

    scales = jnp.stack([diff, mn], axis=0)                 # (2, F)
    if F_work != F:
        scales = jnp.pad(scales, ((0, 0), (0, F_work - F)))

    # Feature tile: full F unless even a sublane-height full-F block would blow
    # the per-buffer budget; then tile F in multiples of 128 (2-D grid).
    if F_work * itemsize * sublane > tile_bytes:
        FB = max(128, (tile_bytes // (sublane * itemsize)) // 128 * 128)
    else:
        FB = F_work

    # Row tile from the per-buffer bytes budget (multiple of the sublane pack).
    TB = max(sublane, (tile_bytes // (FB * itemsize)) // sublane * sublane)
    TB = min(TB, _round_up(B, sublane))

    ni, nj = pl.cdiv(B, TB), pl.cdiv(F_work, FB)
    # With "parallel" semantics we want >= 2 grid steps so both v7x TensorCores
    # get work; split the batch tile if everything fit in one block.
    if ni * nj == 1 and B > sublane:
        TB = max(sublane, _round_up((B + 1) // 2, sublane))
        ni = pl.cdiv(B, TB)

    # 2x double-buffered input + 2x output blocks + scales + slack.
    block_bytes = TB * FB * itemsize
    scales_bytes = 2 * FB * jnp.dtype(compute_dtype).itemsize
    vmem_limit = int(min(max(4 * block_bytes + 2 * scales_bytes + (2 << 20),
                             16 << 20), 96 << 20))

    out = pl.pallas_call(
        _scaling_kernel,
        out_shape=jax.ShapeDtypeStruct((B, F_work), out_dtype),
        grid=(ni, nj),
        in_specs=[
            pl.BlockSpec((TB, FB), lambda i, j: (i, j)),   # x tile, pipelined
            pl.BlockSpec((2, FB), lambda i, j: (0, j)),    # scales, VMEM-resident
        ],
        out_specs=pl.BlockSpec((TB, FB), lambda i, j: (i, j)),
        compiler_params=pltpu.CompilerParams(
            dimension_semantics=("parallel", "parallel"),
            vmem_limit_bytes=vmem_limit,
        ),
    )(x_work, scales)

    if F_work != F:
        out = out[:, :F]
    return out


if __name__ == "__main__":
    key = jax.random.PRNGKey(0)
    k1, k2, k3, k4, k5 = jax.random.split(key, 5)

    # Test 1: module-implied shape (batch=8, out_features=32); force pallas path.
    B, F = 8, 32
    x = jax.random.normal(k1, (B, F), dtype=jnp.float32)
    mn = jax.random.uniform(k2, (F,), dtype=jnp.float32, minval=-1.0, maxval=0.0)
    mx = jax.random.uniform(k3, (F,), dtype=jnp.float32, minval=1.0, maxval=2.0)
    out = jax.block_until_ready(scaling_layer(x, mn, mx, small_threshold=0))
    ref = (mx - mn) * x + mn
    assert out.shape == (B, F)
    assert jnp.allclose(out, ref, atol=1e-6, rtol=1e-6)

    # Test 2: unaligned shapes -> narrow-F pad + ragged (masked) batch edge block.
    B2, F2 = 20, 40
    x2 = jax.random.normal(k4, (B2, F2), dtype=jnp.float32)
    mn2 = jnp.linspace(-1.0, 0.0, F2, dtype=jnp.float32)
    mx2 = jnp.linspace(1.0, 2.0, F2, dtype=jnp.float32)
    out2 = jax.block_until_ready(scaling_layer(x2, mn2, mx2, small_threshold=0))
    ref2 = (mx2 - mn2) * x2 + mn2
    assert out2.shape == (B2, F2)
    assert jnp.allclose(out2, ref2, atol=1e-6, rtol=1e-6)

    # Test 3: F >= 128, not a multiple of 128 -> unpadded full-F blocks, 2 row tiles.
    B3, F3 = 48, 200
    x3 = jax.random.normal(k5, (B3, F3), dtype=jnp.float32)
    mn3 = jnp.linspace(-0.5, 0.5, F3, dtype=jnp.float32)
    mx3 = jnp.linspace(1.5, 2.5, F3, dtype=jnp.float32)
    out3 = jax.block_until_ready(scaling_layer(x3, mn3, mx3, small_threshold=0))
    ref3 = (mx3 - mn3) * x3 + mn3
    assert out3.shape == (B3, F3)
    assert jnp.allclose(out3, ref3, atol=1e-6, rtol=1e-6)

    # Test 4: bf16 compute path (no f32 upcast in kernel; v6e/v7x-friendly).
    B4, F4 = 32, 256
    x4 = jax.random.normal(k1, (B4, F4), dtype=jnp.bfloat16)
    mn4 = jnp.linspace(-1.0, 0.0, F4, dtype=jnp.float32)
    mx4 = jnp.linspace(1.0, 2.0, F4, dtype=jnp.float32)
    out4 = jax.block_until_ready(scaling_layer(x4, mn4, mx4, small_threshold=0))
    ref4 = ((mx4 - mn4) * x4.astype(jnp.float32) + mn4).astype(jnp.bfloat16)
    assert out4.shape == (B4, F4)
    assert jnp.allclose(out4.astype(jnp.float32), ref4.astype(jnp.float32),
                        atol=0.25, rtol=0.05)

    # Test 5: tiny-input auto dispatch (fused XLA expression, no kernel launch).
    out5 = jax.block_until_ready(scaling_layer(x, mn, mx))
    assert jnp.allclose(out5, ref, atol=1e-6, rtol=1e-6)

    print("KERNEL_OK")
</pallas_src>

<mosaic_0001>
module attributes {stable_mosaic.version = 11 : i64} {
  func.func @_scaling_kernel(%arg0: i32, %arg1: i32, %arg2: memref<8x128xf32, #tpu.memory_space<vmem>>, %arg3: memref<2x128xf32, #tpu.memory_space<vmem>>, %arg4: memref<8x128xf32, #tpu.memory_space<vmem>>) attributes {dimension_semantics = [#tpu.dimension_semantics<parallel>, #tpu.dimension_semantics<parallel>], iteration_bounds = array<i64: 1, 1>, scalar_prefetch = 0 : i64, scratch_operands = 0 : i64, tpu.core_type = #tpu.core_type<tc>, window_params = [{transform_indices = @transform_0, window_bounds = array<i64: 8, 128>}, {transform_indices = @transform_1, window_bounds = array<i64: 2, 128>}, {transform_indices = @transform_2, window_bounds = array<i64: 8, 128>}]} {
    %c0 = arith.constant 0 : index
    %c0_0 = arith.constant 0 : index
    %0 = vector.load %arg3[%c0, %c0_0] : memref<2x128xf32, #tpu.memory_space<vmem>>, vector<1x128xf32>
    %c1 = arith.constant 1 : index
    %c0_1 = arith.constant 0 : index
    %1 = vector.load %arg3[%c1, %c0_1] : memref<2x128xf32, #tpu.memory_space<vmem>>, vector<1x128xf32>
    %c0_2 = arith.constant 0 : index
    %c0_3 = arith.constant 0 : index
    %2 = vector.load %arg2[%c0_2, %c0_3] : memref<8x128xf32, #tpu.memory_space<vmem>>, vector<8x128xf32>
    %3 = vector.broadcast %0 : vector<1x128xf32> to vector<8x128xf32>
    %4 = arith.mulf %3, %2 : vector<8x128xf32>
    %5 = vector.broadcast %1 : vector<1x128xf32> to vector<8x128xf32>
    %6 = arith.addf %4, %5 : vector<8x128xf32>
    %c0_4 = arith.constant 0 : index
    %c0_5 = arith.constant 0 : index
    %7 = vector.load %arg4[%c0_4, %c0_5] : memref<8x128xf32, #tpu.memory_space<vmem>>, vector<8x128xf32>
    tpu.vector_store %arg4[%c0_4, %c0_5], %6 {strides = array<i32>} : memref<8x128xf32, #tpu.memory_space<vmem>>, vector<8x128xf32>,
    return
  }
  func.func @transform_0(%arg0: i32, %arg1: i32) -> (i32, i32) {
    %c0_i32 = arith.constant 0 : i32
    return %arg0, %arg1 : i32, i32
  }
  func.func @transform_1(%arg0: i32, %arg1: i32) -> (i32, i32) {
    %c0_i32 = arith.constant 0 : i32
    %c0_i32_0 = arith.constant 0 : i32
    return %c0_i32, %arg1 : i32, i32
  }
  func.func @transform_2(%arg0: i32, %arg1: i32) -> (i32, i32) {
    %c0_i32 = arith.constant 0 : i32
    return %arg0, %arg1 : i32, i32
  }
}

</mosaic_0001>

<llo_original>
// kernel: tpu_custom_call.1
$region0: #{tpu_custom_call.1}
  #allocation0 [shape = 'u32[]', space=smem, size = 0x4, offset = 0x4, fixed_abs, tag = 'smem constant byte address 0x4 - core index']
  #allocation1 [shape = 'u32[144,128]{1,0:T(1,128)}', space=vmem, size = 0x12000, scoped, tag = 'internal scratch']
  %s0 = inlined_call_operand.hbm [shape: f32[8,128], index: 0, kind: input, shape index: {}]
  %s1 = inlined_call_operand.hbm [shape: f32[2,128], index: 1, kind: input, shape index: {}]
  %s2 = inlined_call_operand.hbm [shape: f32[8,128], index: 2, kind: output, shape index: {}]
  %s3 = sld [smem:[#allocation0]]
  $region26: #{tpu_custom_call.1} parent=0
    _
  %s5 = ssub.s32 1, %s3
  %s6 = scalar_select 0, %s5, %s3
  $region1: #{tpu_custom_call.1} parent=0
    #allocation2 [shape = 'u8[4096]{0}', space=vmem, size = 0x1000, scoped, tag = 'input window, operand 0, single buffered']
    #allocation3 [shape = 's32[1]{0}', space=sflag, size = 0x4, scoped, tag = 'scoped memory for tpu_custom_call.1']
    #allocation4 [shape = 's32[1]{0}', space=sflag, size = 0x4, scoped, tag = 'scoped memory for tpu_custom_call.1']
    #allocation5 [shape = 'u8[1024]{0}', space=vmem, size = 0x400, scoped, tag = 'input window, operand 1, single buffered']
    #allocation6 [shape = 's32[1]{0}', space=sflag, size = 0x4, scoped, tag = 'scoped memory for tpu_custom_call.1']
    #allocation7 [shape = 'u8[4096]{0}', space=vmem, size = 0x1000, scoped, tag = 'output window, operand 0, single buffered']
    %7 = vsyncpa [#allocation3], 0
    %8 = vsyncpa [#allocation6], 0
    %9 = vsyncpa [#allocation4], 0
    // Predicated region
    $region2: #{tpu_custom_call.1} parent=1 // pred_check
      _
    $region3: #{tpu_custom_call.1} parent=1 // pred_check_branch
      %11 = sbr.rel (0) target = $region5
    $region4: #{tpu_custom_call.1} parent=1 // pred_region
      %s13 = ssub.s32 128, 128
      %14 = vsyncadd [#allocation3], %s13
      %s16 = sshll.u32 [#allocation2], 4
      %s17 = int_to_ptr.vmem [resolvable:$true] %s16
      %19 = dma.hbm_to_vmem [thread:$0]  %s0, 128, %s17, [#allocation3]
    $region5: #{tpu_custom_call.1} parent=1 // pred_fallthru
      _
    // Predicated region
    $region6: #{tpu_custom_call.1} parent=1 // pred_check
      _
    $region7: #{tpu_custom_call.1} parent=1 // pred_check_branch
      %21 = sbr.rel (0) target = $region9
    $region8: #{tpu_custom_call.1} parent=1 // pred_region
      %s23 = ssub.s32 32, 32
      %24 = vsyncadd [#allocation6], %s23
      %s26 = sshll.u32 [#allocation5], 4
      %s27 = int_to_ptr.vmem [resolvable:$true] %s26
      %29 = dma.hbm_to_vmem [thread:$0]  %s1, 32, %s27, [#allocation6]
    $region9: #{tpu_custom_call.1} parent=1 // pred_fallthru
      _
    // Predicated region
    $region10: #{tpu_custom_call.1} parent=1 // pred_check
      _
    $region11: #{tpu_custom_call.1} parent=1 // pred_check_branch
      %31 = sbr.rel (0) target = $region13
    $region12: #{tpu_custom_call.1} parent=1 // pred_region
      %32 = dma.done [#allocation3], 128
    $region13: #{tpu_custom_call.1} parent=1 // pred_fallthru
      _
    // Predicated region
    $region14: #{tpu_custom_call.1} parent=1 // pred_check
      _
    $region15: #{tpu_custom_call.1} parent=1 // pred_check_branch
      %34 = sbr.rel (0) target = $region17
    $region16: #{tpu_custom_call.1} parent=1 // pred_region
      %35 = dma.done [#allocation6], 32
    $region17: #{tpu_custom_call.1} parent=1 // pred_fallthru
      _
    %v36 = vld [vmem:[#allocation5] sm:$0x1]
    %v37 = vld [vmem:[#allocation5 + $0x1] sm:$0x1]
    %v38 = vld [vmem:[#allocation2] sm:$0xff]
    %v39 = vlaneseq
    %v40 = vshrl.u32 %v39, 7
    %v41 = vsub.s32 0, %v40
    %v42 = vrot.slane %v36, %v41
    %v43 = vmul.f32 %v42, %v38
    %v44 = vlaneseq
    %v45 = vshrl.u32 %v44, 7
    %v46 = vsub.s32 0, %v45
    %v47 = vrot.slane %v37, %v46
    %v48 = vadd.f32 %v43, %v47
    %49 = vst [vmem:[#allocation7] sm:$0xff] %v48
    // Predicated region
    $region18: #{tpu_custom_call.1} parent=1 // pred_check
      _
    $region19: #{tpu_custom_call.1} parent=1 // pred_check_branch
      %51 = sbr.rel (0) target = $region21
    $region20: #{tpu_custom_call.1} parent=1 // pred_region
      %s53 = ssub.s32 128, 128
      %54 = vsyncadd [#allocation4], %s53
      %s56 = sshll.u32 [#allocation7], 4
      %s57 = int_to_ptr.vmem [resolvable:$true] %s56
      %59 = dma.vmem_to_hbm [thread:$0]  %s57, 128, %s2, [#allocation4]
    $region21: #{tpu_custom_call.1} parent=1 // pred_fallthru
      _
    // Predicated region
    $region22: #{tpu_custom_call.1} parent=1 // pred_check
      _
    $region23: #{tpu_custom_call.1} parent=1 // pred_check_branch
      %61 = sbr.rel (0) target = $region25
    $region24: #{tpu_custom_call.1} parent=1 // pred_region
      %62 = dma.done [#allocation4], 128
    $region25: #{tpu_custom_call.1} parent=1 // pred_fallthru
      _
    %63 = vsyncpa [#allocation3], 1
    %64 = vsyncpa [#allocation6], 1
    %65 = vsyncpa [#allocation4], 1

</llo_original>
